<compile_context>
chip_gen: v7x
topology: tpu7x:2x2x1
jax: 0.10.0
libtpu: 0.0.40
codegen_flags: <defaults>
</compile_context>

<pallas_src>
import numpy as np
import jax
import jax.numpy as jnp
from jax.experimental import pallas as pl
from jax.experimental.pallas import tpu as pltpu

# Event-vocabulary layout constants (from the module's __init__)
NOTE_ON_START = 0
NOTE_OFF_START = 128
TIME_SHIFT_START = 256
VELOCITY_START = 768
VOCAB_SIZE = 774

_ENC_SHIFT = 1024          # int32 encode: pos * 1024 + tok  (exact, tok < 1024)
_ENC_MASK = _ENC_SHIFT - 1


def _make_kernel(B, S_orig, S_pad, rhythm_w, harmony_w, voice_w):
    inv_bs = 1.0 / float(B * S_orig)
    inv_b = 1.0 / float(B)

    def kernel(tok_ref, out_ref):
        tok = tok_ref[...]                                              # (B, S_pad) int32
        lane = jax.lax.broadcasted_iota(jnp.int32, (B, S_pad), 1)       # position index
        NEG = jnp.int32(-1)

        def shift_lanes(x, d):
            # value at lane i-d placed at lane i (per-row); lanes < d filled with -1
            return jnp.where(lane >= d, pltpu.roll(x, d, axis=1), NEG)

        def exclusive_prefix_max(x):
            # y[:, i] = max(x[:, :i]),  -1 where the prefix is empty.
            y = shift_lanes(x, 1)
            d = 1
            while d < S_pad:                      # log2(S_pad) XLU rolls, O(S log S) total
                y = jnp.maximum(y, shift_lanes(y, d))
                d *= 2
            return y

        time_mask = jnp.logical_and(tok >= TIME_SHIFT_START, tok < VELOCITY_START)
        note_mask = jnp.logical_and(tok >= NOTE_ON_START, tok < NOTE_OFF_START)

        # ---------------- rhythm regularity ----------------
        enc_time = jnp.where(time_mask, lane, NEG)
        prev_time = exclusive_prefix_max(enc_time)                      # previous time-shift pos
        valid = jnp.logical_and(time_mask, prev_time >= 0)
        diffs = jnp.where(valid, (lane - prev_time).astype(jnp.float32), 0.0)

        n = jnp.sum(valid.astype(jnp.float32), keepdims=True)           # (1, 1)
        s = jnp.sum(diffs, keepdims=True)
        mean = s / jnp.maximum(n, 1.0)
        centered = jnp.where(valid, diffs - mean, 0.0)
        css = jnp.sum(centered * centered, keepdims=True)
        var = css / (n - 1.0)                    # unbiased; n==1 -> NaN, same as torch.var
        rhythm = jnp.where(n >= 1.0, var * 0.01, 0.0)

        # ---------------- harmony consistency ----------------
        prev_tok = shift_lanes(tok, 1)                                  # token at i-1 (-1 at i=0)
        prev_is_note = jnp.logical_and(prev_tok >= NOTE_ON_START, prev_tok < NOTE_OFF_START)
        pair = jnp.logical_and(note_mask, prev_is_note)
        safe_cur = jnp.where(pair, tok, 0)
        safe_prev = jnp.where(pair, prev_tok, 0)
        # exact integer x % 12 for x in [0, 128) via multiply-shift
        pc_cur = safe_cur - ((safe_cur * 43) >> 9) * 12
        pc_prev = safe_prev - ((safe_prev * 43) >> 9) * 12
        iv = pc_cur - pc_prev
        tritone = jnp.logical_and(pair, jnp.logical_or(iv == 6, iv == -6))
        harmony = jnp.sum(tritone.astype(jnp.float32), keepdims=True) * (0.1 * inv_bs)

        # ---------------- voice leading ----------------
        enc_note = jnp.where(note_mask, lane * _ENC_SHIFT + tok, NEG)   # exact int32 encoding
        prev_enc = exclusive_prefix_max(enc_note)
        has_prev = prev_enc >= 0
        prev_val = jnp.bitwise_and(prev_enc, _ENC_MASK)
        dv = tok - prev_val
        leap = jnp.logical_and(jnp.logical_and(note_mask, has_prev),
                               jnp.logical_or(dv > 12, dv < -12))
        voice = jnp.sum(leap.astype(jnp.float32), keepdims=True) * inv_b

        total = rhythm_w * rhythm + harmony_w * harmony + voice_w * voice

        # lane-dense (1, 128) writeback, scalars in lanes 0..3
        lane_out = jax.lax.broadcasted_iota(jnp.int32, (1, 128), 1)
        zero = jnp.float32(0.0)
        out = (jnp.where(lane_out == 0, rhythm, zero)
               + jnp.where(lane_out == 1, harmony, zero)
               + jnp.where(lane_out == 2, voice, zero)
               + jnp.where(lane_out == 3, total, zero))
        out_ref[...] = out

    return kernel


def musical_constraint_loss(generated_tokens,
                            rhythm_weight=1.0,
                            harmony_weight=1.0,
                            voice_leading_weight=0.5,
                            enable_constraints=True):
    """JAX/Pallas equivalent of MusicalConstraintLoss.forward (no learnable params)."""
    tokens = jnp.asarray(generated_tokens, dtype=jnp.int32)
    B, S = tokens.shape

    if not enable_constraints:
        z = jnp.float32(0.0)
        return {"rhythm_constraint": z, "harmony_constraint": z,
                "voice_leading_constraint": z, "total": z}

    # Pad the sequence axis to a multiple of 128 lanes with a velocity token (768),
    # which hits neither the time-shift nor the note-on mask -> no effect on the stats.
    S_pad = max(128, ((S + 127) // 128) * 128)
    if S_pad != S:
        tokens = jnp.pad(tokens, ((0, 0), (0, S_pad - S)),
                         constant_values=VELOCITY_START)

    kernel = _make_kernel(B, S, S_pad, float(rhythm_weight), float(harmony_weight),
                          float(voice_leading_weight))

    # Single invocation: the whole problem is B*S_pad*4 bytes (tiny), so one kernel step
    # is the right granularity on a sequential TensorCore.
    # TODO(synk): for very large B on v7x, shard a batch grid axis across the 2 TCs with
    # per-batch partial sums; skipped here since the kernel is already a few-microsecond op.
    out = pl.pallas_call(
        kernel,
        out_shape=jax.ShapeDtypeStruct((1, 128), jnp.float32),
        grid=(1,),
        in_specs=[pl.BlockSpec((B, S_pad), lambda i: (0, 0))],
        out_specs=pl.BlockSpec((1, 128), lambda i: (0, 0)),
        compiler_params=pltpu.CompilerParams(
            dimension_semantics=("arbitrary",),
            vmem_limit_bytes=32 * 1024 * 1024),
    )(tokens)

    return {"rhythm_constraint": out[0, 0],
            "harmony_constraint": out[0, 1],
            "voice_leading_constraint": out[0, 2],
            "total": out[0, 3]}


def _reference_numpy(tokens, rw=1.0, hw=1.0, vw=0.5):
    """Direct translation of the PyTorch loops, for verification."""
    B, S = tokens.shape
    time_mask = (tokens >= TIME_SHIFT_START) & (tokens < VELOCITY_START)
    note_mask = (tokens >= NOTE_ON_START) & (tokens < NOTE_OFF_START)

    all_diffs = []
    for b in range(B):
        p = np.where(time_mask[b])[0]
        if len(p) > 1:
            all_diffs.append(np.diff(p.astype(np.float32)))
    if time_mask.sum() == 0 or not all_diffs:
        rhythm = 0.0
    else:
        d = np.concatenate(all_diffs)
        rhythm = float(np.var(d, ddof=1)) * 0.01

    penalty = 0.0
    for b in range(B):
        for t in range(S - 1):
            if note_mask[b, t] and note_mask[b, t + 1]:
                if abs(int(tokens[b, t]) % 12 - int(tokens[b, t + 1]) % 12) == 6:
                    penalty += 0.1
    harmony = penalty / (B * S)

    leap = 0.0
    for b in range(B):
        notes = tokens[b][note_mask[b]]
        if len(notes) > 1:
            iv = np.diff(notes.astype(np.float32))
            leap += float((np.abs(iv) > 12).sum())
    voice = leap / B

    total = rw * rhythm + hw * harmony + vw * voice
    return np.array([rhythm, harmony, voice, total], dtype=np.float32)


if __name__ == "__main__":
    key = jax.random.PRNGKey(0)
    B, S = 4, 120                      # non-multiple-of-128 S exercises the padding path
    tokens = jax.random.randint(key, (B, S), 0, VOCAB_SIZE, dtype=jnp.int32)

    losses = musical_constraint_loss(tokens)
    jax.block_until_ready(losses["total"])

    got = np.array([float(losses["rhythm_constraint"]),
                    float(losses["harmony_constraint"]),
                    float(losses["voice_leading_constraint"]),
                    float(losses["total"])], dtype=np.float32)
    ref = _reference_numpy(np.array(tokens))
    np.testing.assert_allclose(got, ref, rtol=1e-3, atol=1e-5)

    print("KERNEL_OK")
</pallas_src>

<mosaic_0001>
module attributes {stable_mosaic.version = 11 : i64} {
  func.func @kernel(%arg0: i32, %arg1: memref<4x128xi32, #tpu.memory_space<vmem>>, %arg2: memref<1x128xf32, #tpu.memory_space<vmem>>) attributes {dimension_semantics = [#tpu.dimension_semantics<arbitrary>], iteration_bounds = array<i64: 1>, scalar_prefetch = 0 : i64, scratch_operands = 0 : i64, tpu.core_type = #tpu.core_type<tc>, window_params = [{pipeline_mode = #tpu.pipeline_mode<synchronous>, transform_indices = @transform_0, window_bounds = array<i64: 4, 128>}, {pipeline_mode = #tpu.pipeline_mode<synchronous>, transform_indices = @transform_1, window_bounds = array<i64: 1, 128>}]} {
    %c0 = arith.constant 0 : index
    %c0_0 = arith.constant 0 : index
    %0 = vector.load %arg1[%c0, %c0_0] : memref<4x128xi32, #tpu.memory_space<vmem>>, vector<4x128xi32>
    %1 = tpu.iota {dimensions = array<i32: 1>} : vector<4x128xi32>
    %c256_i32 = arith.constant 256 : i32
    %2 = vector.broadcast %c256_i32 : i32 to vector<4x128xi32>
    %3 = arith.cmpi sge, %0, %2 : vector<4x128xi32>
    %c768_i32 = arith.constant 768 : i32
    %4 = vector.broadcast %c768_i32 : i32 to vector<4x128xi32>
    %5 = arith.cmpi slt, %0, %4 : vector<4x128xi32>
    %6 = arith.andi %3, %5 : vector<4x128xi1>
    %c0_i32 = arith.constant 0 : i32
    %7 = vector.broadcast %c0_i32 : i32 to vector<4x128xi32>
    %8 = arith.cmpi sge, %0, %7 : vector<4x128xi32>
    %c128_i32 = arith.constant 128 : i32
    %9 = vector.broadcast %c128_i32 : i32 to vector<4x128xi32>
    %10 = arith.cmpi slt, %0, %9 : vector<4x128xi32>
    %11 = arith.andi %8, %10 : vector<4x128xi1>
    %c-1_i32 = arith.constant -1 : i32
    %12 = vector.broadcast %c-1_i32 : i32 to vector<4x128xi32>
    %13 = arith.select %6, %1, %12 : vector<4x128xi1>, vector<4x128xi32>
    %c1_i32 = arith.constant 1 : i32
    %14 = vector.broadcast %c1_i32 : i32 to vector<4x128xi32>
    %15 = arith.cmpi sge, %1, %14 : vector<4x128xi32>
    %c1_i32_1 = arith.constant 1 : i32
    %16 = tpu.dynamic_rotate %13 by %c1_i32_1 dim 1 : vector<4x128xi32>, i32 -> vector<4x128xi32>
    %c-1_i32_2 = arith.constant -1 : i32
    %17 = vector.broadcast %c-1_i32_2 : i32 to vector<4x128xi32>
    %18 = arith.select %15, %16, %17 : vector<4x128xi1>, vector<4x128xi32>
    %c1_i32_3 = arith.constant 1 : i32
    %19 = vector.broadcast %c1_i32_3 : i32 to vector<4x128xi32>
    %20 = arith.cmpi sge, %1, %19 : vector<4x128xi32>
    %c1_i32_4 = arith.constant 1 : i32
    %21 = tpu.dynamic_rotate %18 by %c1_i32_4 dim 1 : vector<4x128xi32>, i32 -> vector<4x128xi32>
    %c-1_i32_5 = arith.constant -1 : i32
    %22 = vector.broadcast %c-1_i32_5 : i32 to vector<4x128xi32>
    %23 = arith.select %20, %21, %22 : vector<4x128xi1>, vector<4x128xi32>
    %24 = arith.maxsi %18, %23 : vector<4x128xi32>
    %c2_i32 = arith.constant 2 : i32
    %25 = vector.broadcast %c2_i32 : i32 to vector<4x128xi32>
    %26 = arith.cmpi sge, %1, %25 : vector<4x128xi32>
    %c2_i32_6 = arith.constant 2 : i32
    %27 = tpu.dynamic_rotate %24 by %c2_i32_6 dim 1 : vector<4x128xi32>, i32 -> vector<4x128xi32>
    %c-1_i32_7 = arith.constant -1 : i32
    %28 = vector.broadcast %c-1_i32_7 : i32 to vector<4x128xi32>
    %29 = arith.select %26, %27, %28 : vector<4x128xi1>, vector<4x128xi32>
    %30 = arith.maxsi %24, %29 : vector<4x128xi32>
    %c4_i32 = arith.constant 4 : i32
    %31 = vector.broadcast %c4_i32 : i32 to vector<4x128xi32>
    %32 = arith.cmpi sge, %1, %31 : vector<4x128xi32>
    %c4_i32_8 = arith.constant 4 : i32
    %33 = tpu.dynamic_rotate %30 by %c4_i32_8 dim 1 : vector<4x128xi32>, i32 -> vector<4x128xi32>
    %c-1_i32_9 = arith.constant -1 : i32
    %34 = vector.broadcast %c-1_i32_9 : i32 to vector<4x128xi32>
    %35 = arith.select %32, %33, %34 : vector<4x128xi1>, vector<4x128xi32>
    %36 = arith.maxsi %30, %35 : vector<4x128xi32>
    %c8_i32 = arith.constant 8 : i32
    %37 = vector.broadcast %c8_i32 : i32 to vector<4x128xi32>
    %38 = arith.cmpi sge, %1, %37 : vector<4x128xi32>
    %c8_i32_10 = arith.constant 8 : i32
    %39 = tpu.dynamic_rotate %36 by %c8_i32_10 dim 1 : vector<4x128xi32>, i32 -> vector<4x128xi32>
    %c-1_i32_11 = arith.constant -1 : i32
    %40 = vector.broadcast %c-1_i32_11 : i32 to vector<4x128xi32>
    %41 = arith.select %38, %39, %40 : vector<4x128xi1>, vector<4x128xi32>
    %42 = arith.maxsi %36, %41 : vector<4x128xi32>
    %c16_i32 = arith.constant 16 : i32
    %43 = vector.broadcast %c16_i32 : i32 to vector<4x128xi32>
    %44 = arith.cmpi sge, %1, %43 : vector<4x128xi32>
    %c16_i32_12 = arith.constant 16 : i32
    %45 = tpu.dynamic_rotate %42 by %c16_i32_12 dim 1 : vector<4x128xi32>, i32 -> vector<4x128xi32>
    %c-1_i32_13 = arith.constant -1 : i32
    %46 = vector.broadcast %c-1_i32_13 : i32 to vector<4x128xi32>
    %47 = arith.select %44, %45, %46 : vector<4x128xi1>, vector<4x128xi32>
    %48 = arith.maxsi %42, %47 : vector<4x128xi32>
    %c32_i32 = arith.constant 32 : i32
    %49 = vector.broadcast %c32_i32 : i32 to vector<4x128xi32>
    %50 = arith.cmpi sge, %1, %49 : vector<4x128xi32>
    %c32_i32_14 = arith.constant 32 : i32
    %51 = tpu.dynamic_rotate %48 by %c32_i32_14 dim 1 : vector<4x128xi32>, i32 -> vector<4x128xi32>
    %c-1_i32_15 = arith.constant -1 : i32
    %52 = vector.broadcast %c-1_i32_15 : i32 to vector<4x128xi32>
    %53 = arith.select %50, %51, %52 : vector<4x128xi1>, vector<4x128xi32>
    %54 = arith.maxsi %48, %53 : vector<4x128xi32>
    %c64_i32 = arith.constant 64 : i32
    %55 = vector.broadcast %c64_i32 : i32 to vector<4x128xi32>
    %56 = arith.cmpi sge, %1, %55 : vector<4x128xi32>
    %c64_i32_16 = arith.constant 64 : i32
    %57 = tpu.dynamic_rotate %54 by %c64_i32_16 dim 1 : vector<4x128xi32>, i32 -> vector<4x128xi32>
    %c-1_i32_17 = arith.constant -1 : i32
    %58 = vector.broadcast %c-1_i32_17 : i32 to vector<4x128xi32>
    %59 = arith.select %56, %57, %58 : vector<4x128xi1>, vector<4x128xi32>
    %60 = arith.maxsi %54, %59 : vector<4x128xi32>
    %c0_i32_18 = arith.constant 0 : i32
    %61 = vector.broadcast %c0_i32_18 : i32 to vector<4x128xi32>
    %62 = arith.cmpi sge, %60, %61 : vector<4x128xi32>
    %63 = arith.andi %6, %62 : vector<4x128xi1>
    %64 = arith.subi %1, %60 : vector<4x128xi32>
    %65 = arith.sitofp %64 : vector<4x128xi32> to vector<4x128xf32>
    %cst = arith.constant 0.000000e+00 : f32
    %66 = vector.broadcast %cst : f32 to vector<4x128xf32>
    %67 = arith.select %63, %65, %66 : vector<4x128xi1>, vector<4x128xf32>
    %68 = arith.extui %63 : vector<4x128xi1> to vector<4x128xi32>
    %69 = arith.sitofp %68 : vector<4x128xi32> to vector<4x128xf32>
    %70 = vector.shape_cast %69 : vector<4x128xf32> to vector<1x4x128xf32>
    %cst_19 = arith.constant dense<0.000000e+00> : vector<1xf32>
    %71 = vector.multi_reduction <add>, %70, %cst_19 [1, 2] : vector<1x4x128xf32> to vector<1xf32>
    %72 = vector.shape_cast %71 : vector<1xf32> to vector<1x1x1xf32>
    %73 = vector.extract %72[0, 0, 0] : f32 from vector<1x1x1xf32>
    %74 = vector.broadcast %73 : f32 to vector<1x1xf32>
    %75 = vector.shape_cast %67 : vector<4x128xf32> to vector<1x4x128xf32>
    %cst_20 = arith.constant dense<0.000000e+00> : vector<1xf32>
    %76 = vector.multi_reduction <add>, %75, %cst_20 [1, 2] : vector<1x4x128xf32> to vector<1xf32>
    %77 = vector.shape_cast %76 : vector<1xf32> to vector<1x1x1xf32>
    %78 = vector.extract %77[0, 0, 0] : f32 from vector<1x1x1xf32>
    %79 = vector.broadcast %78 : f32 to vector<1x1xf32>
    %cst_21 = arith.constant 1.000000e+00 : f32
    %80 = vector.broadcast %cst_21 : f32 to vector<1x1xf32>
    %81 = arith.maximumf %74, %80 : vector<1x1xf32>
    %82 = arith.divf %79, %81 : vector<1x1xf32>
    %83 = vector.broadcast %82 : vector<1x1xf32> to vector<4x128xf32>
    %84 = arith.subf %67, %83 : vector<4x128xf32>
    %cst_22 = arith.constant 0.000000e+00 : f32
    %85 = vector.broadcast %cst_22 : f32 to vector<4x128xf32>
    %86 = arith.select %63, %84, %85 : vector<4x128xi1>, vector<4x128xf32>
    %87 = arith.mulf %86, %86 : vector<4x128xf32>
    %88 = vector.shape_cast %87 : vector<4x128xf32> to vector<1x4x128xf32>
    %cst_23 = arith.constant dense<0.000000e+00> : vector<1xf32>
    %89 = vector.multi_reduction <add>, %88, %cst_23 [1, 2] : vector<1x4x128xf32> to vector<1xf32>
    %90 = vector.shape_cast %89 : vector<1xf32> to vector<1x1x1xf32>
    %91 = vector.extract %90[0, 0, 0] : f32 from vector<1x1x1xf32>
    %92 = vector.broadcast %91 : f32 to vector<1x1xf32>
    %cst_24 = arith.constant 1.000000e+00 : f32
    %93 = vector.broadcast %cst_24 : f32 to vector<1x1xf32>
    %94 = arith.subf %74, %93 : vector<1x1xf32>
    %95 = arith.divf %92, %94 : vector<1x1xf32>
    %cst_25 = arith.constant 1.000000e+00 : f32
    %96 = vector.broadcast %cst_25 : f32 to vector<1x1xf32>
    %97 = arith.cmpf oge, %74, %96 : vector<1x1xf32>
    %cst_26 = arith.constant 0.00999999977 : f32
    %98 = vector.broadcast %cst_26 : f32 to vector<1x1xf32>
    %99 = arith.mulf %95, %98 : vector<1x1xf32>
    %cst_27 = arith.constant 0.000000e+00 : f32
    %100 = vector.broadcast %cst_27 : f32 to vector<1x1xf32>
    %101 = arith.select %97, %99, %100 : vector<1x1xi1>, vector<1x1xf32>
    %c1_i32_28 = arith.constant 1 : i32
    %102 = vector.broadcast %c1_i32_28 : i32 to vector<4x128xi32>
    %103 = arith.cmpi sge, %1, %102 : vector<4x128xi32>
    %c1_i32_29 = arith.constant 1 : i32
    %104 = tpu.dynamic_rotate %0 by %c1_i32_29 dim 1 : vector<4x128xi32>, i32 -> vector<4x128xi32>
    %c-1_i32_30 = arith.constant -1 : i32
    %105 = vector.broadcast %c-1_i32_30 : i32 to vector<4x128xi32>
    %106 = arith.select %103, %104, %105 : vector<4x128xi1>, vector<4x128xi32>
    %c0_i32_31 = arith.constant 0 : i32
    %107 = vector.broadcast %c0_i32_31 : i32 to vector<4x128xi32>
    %108 = arith.cmpi sge, %106, %107 : vector<4x128xi32>
    %c128_i32_32 = arith.constant 128 : i32
    %109 = vector.broadcast %c128_i32_32 : i32 to vector<4x128xi32>
    %110 = arith.cmpi slt, %106, %109 : vector<4x128xi32>
    %111 = arith.andi %108, %110 : vector<4x128xi1>
    %112 = arith.andi %11, %111 : vector<4x128xi1>
    %c0_i32_33 = arith.constant 0 : i32
    %113 = vector.broadcast %c0_i32_33 : i32 to vector<4x128xi32>
    %114 = arith.select %112, %0, %113 : vector<4x128xi1>, vector<4x128xi32>
    %c0_i32_34 = arith.constant 0 : i32
    %115 = vector.broadcast %c0_i32_34 : i32 to vector<4x128xi32>
    %116 = arith.select %112, %106, %115 : vector<4x128xi1>, vector<4x128xi32>
    %c43_i32 = arith.constant 43 : i32
    %117 = vector.broadcast %c43_i32 : i32 to vector<4x128xi32>
    %118 = arith.muli %114, %117 : vector<4x128xi32>
    %c9_i32 = arith.constant 9 : i32
    %119 = vector.broadcast %c9_i32 : i32 to vector<4x128xi32>
    %120 = arith.shrsi %118, %119 : vector<4x128xi32>
    %c12_i32 = arith.constant 12 : i32
    %121 = vector.broadcast %c12_i32 : i32 to vector<4x128xi32>
    %122 = arith.muli %120, %121 : vector<4x128xi32>
    %123 = arith.subi %114, %122 : vector<4x128xi32>
    %c43_i32_35 = arith.constant 43 : i32
    %124 = vector.broadcast %c43_i32_35 : i32 to vector<4x128xi32>
    %125 = arith.muli %116, %124 : vector<4x128xi32>
    %c9_i32_36 = arith.constant 9 : i32
    %126 = vector.broadcast %c9_i32_36 : i32 to vector<4x128xi32>
    %127 = arith.shrsi %125, %126 : vector<4x128xi32>
    %c12_i32_37 = arith.constant 12 : i32
    %128 = vector.broadcast %c12_i32_37 : i32 to vector<4x128xi32>
    %129 = arith.muli %127, %128 : vector<4x128xi32>
    %130 = arith.subi %116, %129 : vector<4x128xi32>
    %131 = arith.subi %123, %130 : vector<4x128xi32>
    %c6_i32 = arith.constant 6 : i32
    %132 = vector.broadcast %c6_i32 : i32 to vector<4x128xi32>
    %133 = arith.cmpi eq, %131, %132 : vector<4x128xi32>
    %c-6_i32 = arith.constant -6 : i32
    %134 = vector.broadcast %c-6_i32 : i32 to vector<4x128xi32>
    %135 = arith.cmpi eq, %131, %134 : vector<4x128xi32>
    %136 = arith.ori %133, %135 : vector<4x128xi1>
    %137 = arith.andi %112, %136 : vector<4x128xi1>
    %138 = arith.extui %137 : vector<4x128xi1> to vector<4x128xi32>
    %139 = arith.sitofp %138 : vector<4x128xi32> to vector<4x128xf32>
    %140 = vector.shape_cast %139 : vector<4x128xf32> to vector<1x4x128xf32>
    %cst_38 = arith.constant dense<0.000000e+00> : vector<1xf32>
    %141 = vector.multi_reduction <add>, %140, %cst_38 [1, 2] : vector<1x4x128xf32> to vector<1xf32>
    %142 = vector.shape_cast %141 : vector<1xf32> to vector<1x1x1xf32>
    %143 = vector.extract %142[0, 0, 0] : f32 from vector<1x1x1xf32>
    %144 = vector.broadcast %143 : f32 to vector<1x1xf32>
    %cst_39 = arith.constant 2.08333338E-4 : f32
    %145 = vector.broadcast %cst_39 : f32 to vector<1x1xf32>
    %146 = arith.mulf %144, %145 : vector<1x1xf32>
    %c1024_i32 = arith.constant 1024 : i32
    %147 = vector.broadcast %c1024_i32 : i32 to vector<4x128xi32>
    %148 = arith.muli %1, %147 : vector<4x128xi32>
    %149 = arith.addi %148, %0 : vector<4x128xi32>
    %c-1_i32_40 = arith.constant -1 : i32
    %150 = vector.broadcast %c-1_i32_40 : i32 to vector<4x128xi32>
    %151 = arith.select %11, %149, %150 : vector<4x128xi1>, vector<4x128xi32>
    %c1_i32_41 = arith.constant 1 : i32
    %152 = vector.broadcast %c1_i32_41 : i32 to vector<4x128xi32>
    %153 = arith.cmpi sge, %1, %152 : vector<4x128xi32>
    %c1_i32_42 = arith.constant 1 : i32
    %154 = tpu.dynamic_rotate %151 by %c1_i32_42 dim 1 : vector<4x128xi32>, i32 -> vector<4x128xi32>
    %c-1_i32_43 = arith.constant -1 : i32
    %155 = vector.broadcast %c-1_i32_43 : i32 to vector<4x128xi32>
    %156 = arith.select %153, %154, %155 : vector<4x128xi1>, vector<4x128xi32>
    %c1_i32_44 = arith.constant 1 : i32
    %157 = vector.broadcast %c1_i32_44 : i32 to vector<4x128xi32>
    %158 = arith.cmpi sge, %1, %157 : vector<4x128xi32>
    %c1_i32_45 = arith.constant 1 : i32
    %159 = tpu.dynamic_rotate %156 by %c1_i32_45 dim 1 : vector<4x128xi32>, i32 -> vector<4x128xi32>
    %c-1_i32_46 = arith.constant -1 : i32
    %160 = vector.broadcast %c-1_i32_46 : i32 to vector<4x128xi32>
    %161 = arith.select %158, %159, %160 : vector<4x128xi1>, vector<4x128xi32>
    %162 = arith.maxsi %156, %161 : vector<4x128xi32>
    %c2_i32_47 = arith.constant 2 : i32
    %163 = vector.broadcast %c2_i32_47 : i32 to vector<4x128xi32>
    %164 = arith.cmpi sge, %1, %163 : vector<4x128xi32>
    %c2_i32_48 = arith.constant 2 : i32
    %165 = tpu.dynamic_rotate %162 by %c2_i32_48 dim 1 : vector<4x128xi32>, i32 -> vector<4x128xi32>
    %c-1_i32_49 = arith.constant -1 : i32
    %166 = vector.broadcast %c-1_i32_49 : i32 to vector<4x128xi32>
    %167 = arith.select %164, %165, %166 : vector<4x128xi1>, vector<4x128xi32>
    %168 = arith.maxsi %162, %167 : vector<4x128xi32>
    %c4_i32_50 = arith.constant 4 : i32
    %169 = vector.broadcast %c4_i32_50 : i32 to vector<4x128xi32>
    %170 = arith.cmpi sge, %1, %169 : vector<4x128xi32>
    %c4_i32_51 = arith.constant 4 : i32
    %171 = tpu.dynamic_rotate %168 by %c4_i32_51 dim 1 : vector<4x128xi32>, i32 -> vector<4x128xi32>
    %c-1_i32_52 = arith.constant -1 : i32
    %172 = vector.broadcast %c-1_i32_52 : i32 to vector<4x128xi32>
    %173 = arith.select %170, %171, %172 : vector<4x128xi1>, vector<4x128xi32>
    %174 = arith.maxsi %168, %173 : vector<4x128xi32>
    %c8_i32_53 = arith.constant 8 : i32
    %175 = vector.broadcast %c8_i32_53 : i32 to vector<4x128xi32>
    %176 = arith.cmpi sge, %1, %175 : vector<4x128xi32>
    %c8_i32_54 = arith.constant 8 : i32
    %177 = tpu.dynamic_rotate %174 by %c8_i32_54 dim 1 : vector<4x128xi32>, i32 -> vector<4x128xi32>
    %c-1_i32_55 = arith.constant -1 : i32
    %178 = vector.broadcast %c-1_i32_55 : i32 to vector<4x128xi32>
    %179 = arith.select %176, %177, %178 : vector<4x128xi1>, vector<4x128xi32>
    %180 = arith.maxsi %174, %179 : vector<4x128xi32>
    %c16_i32_56 = arith.constant 16 : i32
    %181 = vector.broadcast %c16_i32_56 : i32 to vector<4x128xi32>
    %182 = arith.cmpi sge, %1, %181 : vector<4x128xi32>
    %c16_i32_57 = arith.constant 16 : i32
    %183 = tpu.dynamic_rotate %180 by %c16_i32_57 dim 1 : vector<4x128xi32>, i32 -> vector<4x128xi32>
    %c-1_i32_58 = arith.constant -1 : i32
    %184 = vector.broadcast %c-1_i32_58 : i32 to vector<4x128xi32>
    %185 = arith.select %182, %183, %184 : vector<4x128xi1>, vector<4x128xi32>
    %186 = arith.maxsi %180, %185 : vector<4x128xi32>
    %c32_i32_59 = arith.constant 32 : i32
    %187 = vector.broadcast %c32_i32_59 : i32 to vector<4x128xi32>
    %188 = arith.cmpi sge, %1, %187 : vector<4x128xi32>
    %c32_i32_60 = arith.constant 32 : i32
    %189 = tpu.dynamic_rotate %186 by %c32_i32_60 dim 1 : vector<4x128xi32>, i32 -> vector<4x128xi32>
    %c-1_i32_61 = arith.constant -1 : i32
    %190 = vector.broadcast %c-1_i32_61 : i32 to vector<4x128xi32>
    %191 = arith.select %188, %189, %190 : vector<4x128xi1>, vector<4x128xi32>
    %192 = arith.maxsi %186, %191 : vector<4x128xi32>
    %c64_i32_62 = arith.constant 64 : i32
    %193 = vector.broadcast %c64_i32_62 : i32 to vector<4x128xi32>
    %194 = arith.cmpi sge, %1, %193 : vector<4x128xi32>
    %c64_i32_63 = arith.constant 64 : i32
    %195 = tpu.dynamic_rotate %192 by %c64_i32_63 dim 1 : vector<4x128xi32>, i32 -> vector<4x128xi32>
    %c-1_i32_64 = arith.constant -1 : i32
    %196 = vector.broadcast %c-1_i32_64 : i32 to vector<4x128xi32>
    %197 = arith.select %194, %195, %196 : vector<4x128xi1>, vector<4x128xi32>
    %198 = arith.maxsi %192, %197 : vector<4x128xi32>
    %c0_i32_65 = arith.constant 0 : i32
    %199 = vector.broadcast %c0_i32_65 : i32 to vector<4x128xi32>
    %200 = arith.cmpi sge, %198, %199 : vector<4x128xi32>
    %c1023_i32 = arith.constant 1023 : i32
    %201 = vector.broadcast %c1023_i32 : i32 to vector<4x128xi32>
    %202 = arith.andi %198, %201 : vector<4x128xi32>
    %203 = arith.subi %0, %202 : vector<4x128xi32>
    %204 = arith.andi %11, %200 : vector<4x128xi1>
    %c12_i32_66 = arith.constant 12 : i32
    %205 = vector.broadcast %c12_i32_66 : i32 to vector<4x128xi32>
    %206 = arith.cmpi sgt, %203, %205 : vector<4x128xi32>
    %c-12_i32 = arith.constant -12 : i32
    %207 = vector.broadcast %c-12_i32 : i32 to vector<4x128xi32>
    %208 = arith.cmpi slt, %203, %207 : vector<4x128xi32>
    %209 = arith.ori %206, %208 : vector<4x128xi1>
    %210 = arith.andi %204, %209 : vector<4x128xi1>
    %211 = arith.extui %210 : vector<4x128xi1> to vector<4x128xi32>
    %212 = arith.sitofp %211 : vector<4x128xi32> to vector<4x128xf32>
    %213 = vector.shape_cast %212 : vector<4x128xf32> to vector<1x4x128xf32>
    %cst_67 = arith.constant dense<0.000000e+00> : vector<1xf32>
    %214 = vector.multi_reduction <add>, %213, %cst_67 [1, 2] : vector<1x4x128xf32> to vector<1xf32>
    %215 = vector.shape_cast %214 : vector<1xf32> to vector<1x1x1xf32>
    %216 = vector.extract %215[0, 0, 0] : f32 from vector<1x1x1xf32>
    %217 = vector.broadcast %216 : f32 to vector<1x1xf32>
    %cst_68 = arith.constant 2.500000e-01 : f32
    %218 = vector.broadcast %cst_68 : f32 to vector<1x1xf32>
    %219 = arith.mulf %217, %218 : vector<1x1xf32>
    %cst_69 = arith.constant 1.000000e+00 : f32
    %220 = vector.broadcast %cst_69 : f32 to vector<1x1xf32>
    %221 = arith.mulf %220, %101 : vector<1x1xf32>
    %cst_70 = arith.constant 1.000000e+00 : f32
    %222 = vector.broadcast %cst_70 : f32 to vector<1x1xf32>
    %223 = arith.mulf %222, %146 : vector<1x1xf32>
    %224 = arith.addf %221, %223 : vector<1x1xf32>
    %cst_71 = arith.constant 5.000000e-01 : f32
    %225 = vector.broadcast %cst_71 : f32 to vector<1x1xf32>
    %226 = arith.mulf %225, %219 : vector<1x1xf32>
    %227 = arith.addf %224, %226 : vector<1x1xf32>
    %228 = tpu.iota {dimensions = array<i32: 1>} : vector<1x128xi32>
    %c0_i32_72 = arith.constant 0 : i32
    %229 = vector.broadcast %c0_i32_72 : i32 to vector<1x128xi32>
    %230 = arith.cmpi eq, %228, %229 : vector<1x128xi32>
    %cst_73 = arith.constant 0.000000e+00 : f32
    %231 = vector.shape_cast %101 : vector<1x1xf32> to vector<1x1xf32>
    %232 = vector.broadcast %231 : vector<1x1xf32> to vector<1x128xf32>
    %233 = vector.broadcast %cst_73 : f32 to vector<1x128xf32>
    %234 = arith.select %230, %232, %233 : vector<1x128xi1>, vector<1x128xf32>
    %c1_i32_74 = arith.constant 1 : i32
    %235 = vector.broadcast %c1_i32_74 : i32 to vector<1x128xi32>
    %236 = arith.cmpi eq, %228, %235 : vector<1x128xi32>
    %cst_75 = arith.constant 0.000000e+00 : f32
    %237 = vector.shape_cast %146 : vector<1x1xf32> to vector<1x1xf32>
    %238 = vector.broadcast %237 : vector<1x1xf32> to vector<1x128xf32>
    %239 = vector.broadcast %cst_75 : f32 to vector<1x128xf32>
    %240 = arith.select %236, %238, %239 : vector<1x128xi1>, vector<1x128xf32>
    %241 = arith.addf %234, %240 : vector<1x128xf32>
    %c2_i32_76 = arith.constant 2 : i32
    %242 = vector.broadcast %c2_i32_76 : i32 to vector<1x128xi32>
    %243 = arith.cmpi eq, %228, %242 : vector<1x128xi32>
    %cst_77 = arith.constant 0.000000e+00 : f32
    %244 = vector.shape_cast %219 : vector<1x1xf32> to vector<1x1xf32>
    %245 = vector.broadcast %244 : vector<1x1xf32> to vector<1x128xf32>
    %246 = vector.broadcast %cst_77 : f32 to vector<1x128xf32>
    %247 = arith.select %243, %245, %246 : vector<1x128xi1>, vector<1x128xf32>
    %248 = arith.addf %241, %247 : vector<1x128xf32>
    %c3_i32 = arith.constant 3 : i32
    %249 = vector.broadcast %c3_i32 : i32 to vector<1x128xi32>
    %250 = arith.cmpi eq, %228, %249 : vector<1x128xi32>
    %cst_78 = arith.constant 0.000000e+00 : f32
    %251 = vector.shape_cast %227 : vector<1x1xf32> to vector<1x1xf32>
    %252 = vector.broadcast %251 : vector<1x1xf32> to vector<1x128xf32>
    %253 = vector.broadcast %cst_78 : f32 to vector<1x128xf32>
    %254 = arith.select %250, %252, %253 : vector<1x128xi1>, vector<1x128xf32>
    %255 = arith.addf %248, %254 : vector<1x128xf32>
    %c0_79 = arith.constant 0 : index
    %c0_80 = arith.constant 0 : index
    %256 = vector.load %arg2[%c0_79, %c0_80] : memref<1x128xf32, #tpu.memory_space<vmem>>, vector<1x128xf32>
    tpu.vector_store %arg2[%c0_79, %c0_80], %255 {strides = array<i32>} : memref<1x128xf32, #tpu.memory_space<vmem>>, vector<1x128xf32>,
    return
  }
  func.func @transform_0(%arg0: i32) -> (i32, i32) {
    %c0_i32 = arith.constant 0 : i32
    %c0_i32_0 = arith.constant 0 : i32
    %c0_i32_1 = arith.constant 0 : i32
    return %c0_i32, %c0_i32_0 : i32, i32
  }
  func.func @transform_1(%arg0: i32) -> (i32, i32) {
    %c0_i32 = arith.constant 0 : i32
    %c0_i32_0 = arith.constant 0 : i32
    %c0_i32_1 = arith.constant 0 : i32
    return %c0_i32, %c0_i32_0 : i32, i32
  }
}

</mosaic_0001>

<llo_original>
// kernel: tpu_custom_call.1
$region0: #{tpu_custom_call.1}
  #allocation0 [shape = 'u32[]', space=smem, size = 0x4, offset = 0x4, fixed_abs, tag = 'smem constant byte address 0x4 - core index']
  #allocation1 [shape = 'u32[144,128]{1,0:T(1,128)}', space=vmem, size = 0x12000, scoped, tag = 'internal scratch']
  %s0 = inlined_call_operand.hbm [shape: s32[4,128], index: 0, kind: input, shape index: {}]
  %s1 = inlined_call_operand.hbm [shape: f32[1,128], index: 1, kind: output, shape index: {}]
  %s2 = sld [smem:[#allocation0]]
  $region18: #{tpu_custom_call.1} parent=0
    _
  %s4 = ssub.s32 1, %s2
  %s5 = scalar_select 0, %s4, %s2
  $region1: #{tpu_custom_call.1} parent=0
    #allocation2 [shape = 'u8[2048]{0}', space=vmem, size = 0x800, scoped, tag = 'input window, operand 0, single buffered']
    #allocation3 [shape = 's32[1]{0}', space=sflag, size = 0x4, scoped, tag = 'scoped memory for tpu_custom_call.1']
    #allocation4 [shape = 's32[1]{0}', space=sflag, size = 0x4, scoped, tag = 'scoped memory for tpu_custom_call.1']
    #allocation5 [shape = 'u8[512]{0}', space=vmem, size = 0x400, scoped, tag = 'output window, operand 0, single buffered']
    %6 = vsyncpa [#allocation3], 0
    %7 = vsyncpa [#allocation4], 0
    // Predicated region
    $region2: #{tpu_custom_call.1} parent=1 // pred_check
      _
    $region3: #{tpu_custom_call.1} parent=1 // pred_check_branch
      %9 = sbr.rel (0) target = $region5
    $region4: #{tpu_custom_call.1} parent=1 // pred_region
      %s11 = ssub.s32 64, 64
      %12 = vsyncadd [#allocation3], %s11
      %s14 = sshll.u32 [#allocation2], 4
      %s15 = int_to_ptr.vmem [resolvable:$true] %s14
      %17 = dma.hbm_to_vmem [thread:$0]  %s0, 64, %s15, [#allocation3]
    $region5: #{tpu_custom_call.1} parent=1 // pred_fallthru
      _
    // Predicated region
    $region6: #{tpu_custom_call.1} parent=1 // pred_check
      _
    $region7: #{tpu_custom_call.1} parent=1 // pred_check_branch
      %19 = sbr.rel (0) target = $region9
    $region8: #{tpu_custom_call.1} parent=1 // pred_region
      %20 = dma.done [#allocation3], 64
    $region9: #{tpu_custom_call.1} parent=1 // pred_fallthru
      _
    %v21 = vld [vmem:[#allocation2] sm:$0xf]
    %v22 = vlaneseq
    %v23 = vand.u32 %v22, 127
    %vm24 = vcmp.ge.s32.totalorder %v21, 256
    %vm25 = vcmp.lt.s32.totalorder %v21, 768
    %vm26 = vmand %vm24, %vm25
    %vm27 = vcmp.ge.s32.totalorder %v21, 0
    %vm28 = vcmp.lt.s32.totalorder %v21, 128
    %vm29 = vmand %vm27, %vm28
    %v30 = vsel %vm26, %v23, 4294967295
    %vm31 = vcmp.ge.s32.totalorder %v23, 1
    %32 = vrot.lane.b32.xlu0 %v30, 1
    %v33 = vpop.permute.xlu0 %32
    %v34 = vsel %vm31, %v33, 4294967295
    %35 = vrot.lane.b32.xlu0 %v34, 1
    %v36 = vpop.permute.xlu0 %35
    %v37 = vsel %vm31, %v36, 4294967295
    %vm38 = vcmp.gt.s32.totalorder %v34, %v37
    %v39 = vsel %vm38, %v34, %v37
    %vm40 = vcmp.ge.s32.totalorder %v23, 2
    %41 = vrot.lane.b32.xlu0 %v39, 2
    %v42 = vpop.permute.xlu0 %41
    %v43 = vsel %vm40, %v42, 4294967295
    %vm44 = vcmp.gt.s32.totalorder %v39, %v43
    %v45 = vsel %vm44, %v39, %v43
    %vm46 = vcmp.ge.s32.totalorder %v23, 4
    %47 = vrot.lane.b32.xlu0 %v45, 4
    %v48 = vpop.permute.xlu0 %47
    %v49 = vsel %vm46, %v48, 4294967295
    %vm50 = vcmp.gt.s32.totalorder %v45, %v49
    %v51 = vsel %vm50, %v45, %v49
    %vm52 = vcmp.ge.s32.totalorder %v23, 8
    %53 = vrot.lane.b32.xlu0 %v51, 8
    %v54 = vpop.permute.xlu0 %53
    %v55 = vsel %vm52, %v54, 4294967295
    %vm56 = vcmp.gt.s32.totalorder %v51, %v55
    %v57 = vsel %vm56, %v51, %v55
    %vm58 = vcmp.ge.s32.totalorder %v23, 16
    %59 = vrot.lane.b32.xlu0 %v57, 16
    %v60 = vpop.permute.xlu0 %59
    %v61 = vsel %vm58, %v60, 4294967295
    %vm62 = vcmp.gt.s32.totalorder %v57, %v61
    %v63 = vsel %vm62, %v57, %v61
    %vm64 = vcmp.ge.s32.totalorder %v23, 32
    %65 = vrot.lane.b32.xlu0 %v63, 32
    %v66 = vpop.permute.xlu0 %65
    %v67 = vsel %vm64, %v66, 4294967295
    %vm68 = vcmp.gt.s32.totalorder %v63, %v67
    %v69 = vsel %vm68, %v63, %v67
    %vm70 = vcmp.ge.s32.totalorder %v23, 64
    %71 = vrot.lane.b32.xlu0 %v69, 64
    %v72 = vpop.permute.xlu0 %71
    %v73 = vsel %vm70, %v72, 4294967295
    %vm74 = vcmp.gt.s32.totalorder %v69, %v73
    %v75 = vsel %vm74, %v69, %v73
    %vm76 = vcmp.ge.s32.totalorder %v75, 0
    %vm77 = vmand %vm26, %vm76
    %v78 = vsub.s32 %v23, %v75
    %v79 = vcvt.s32.f32 %v78
    %v80 = vsel %vm77, %v79, 0.0
    %v81 = vsel %vm77, 1, 0
    %v82 = vcvt.s32.f32 %v81
    %vm83 = vcmask 1043456
    %v84 = vsel %vm83, %v82, 0.0
    %85 = vadd.xlane.f32.xlu0 %v84
    %v86 = vpop.xlane.xlu0 %85
    %v87 = vrot.slane %v86, 4
    %v88 = vadd.f32 %v86, %v87
    %v89 = vrot.slane %v88, 2
    %v90 = vadd.f32 %v88, %v89
    %v91 = vrot.slane %v90, 1
    %v92 = vadd.f32 %v90, %v91
    %s93 = vtos %v92
    %v94 = vstv %s93
    %v95 = vsel %vm83, %v80, 0.0
    %96 = vadd.xlane.f32.xlu0 %v95
    %v97 = vpop.xlane.xlu0 %96
    %v98 = vrot.slane %v97, 4
    %v99 = vadd.f32 %v97, %v98
    %v100 = vrot.slane %v99, 2
    %v101 = vadd.f32 %v99, %v100
    %v102 = vrot.slane %v101, 1
    %v103 = vadd.f32 %v101, %v102
    %s104 = vtos %v103
    %v105 = vstv %s104
    %v106 = vmax.f32 %v94, 1.0
    %v107 = vrcp.pop %v106
    %v108 = vmul.f32 %v105, %v107
    %v109 = vsub.f32 %v80, %v108
    %v110 = vsel %vm77, %v109, 0.0
    %v111 = vmul.f32 %v110, %v110
    %v112 = vsel %vm83, %v111, 0.0
    %113 = vadd.xlane.f32.xlu0 %v112
    %v114 = vpop.xlane.xlu0 %113
    %v115 = vrot.slane %v114, 4
    %v116 = vadd.f32 %v114, %v115
    %v117 = vrot.slane %v116, 2
    %v118 = vadd.f32 %v116, %v117
    %v119 = vrot.slane %v118, 1
    %v120 = vadd.f32 %v118, %v119
    %s121 = vtos %v120
    %v122 = vstv %s121
    %v123 = vsub.f32 %v94, 1.0
    %v124 = vrcp.pop %v123
    %v125 = vmul.f32 %v122, %v124
    %vm126 = vcmp.ge.f32.partialorder %v94, 1.0
    %v127 = vmul.f32 %v125, 0.01
    %v128 = vsel %vm126, %v127, 0.0
    %129 = vrot.lane.b32.xlu0 %v21, 1
    %v130 = vpop.permute.xlu0 %129
    %v131 = vsel %vm31, %v130, 4294967295
    %vm132 = vcmp.ge.s32.totalorder %v131, 0
    %vm133 = vcmp.lt.s32.totalorder %v131, 128
    %vm134 = vmand %vm132, %vm133
    %vm135 = vmand %vm29, %vm134
    %v136 = vsel %vm135, %v21, 0
    %v137 = vsel %vm135, %v131, 0
    %v138 = vmul.u32 %v136, 43
    %v139 = vshra.s32 %v138, 9
    %v140 = vmul.u32 %v139, 12
    %v141 = vsub.s32 %v136, %v140
    %v142 = vmul.u32 %v137, 43
    %v143 = vshra.s32 %v142, 9
    %v144 = vmul.u32 %v143, 12
    %v145 = vsub.s32 %v137, %v144
    %v146 = vsub.s32 %v141, %v145
    %vm147 = vcmp.eq.s32.totalorder %v146, 6
    %vm148 = vcmp.eq.s32.totalorder %v146, 4294967290
    %vm149 = vmor %vm147, %vm148
    %vm150 = vmand %vm135, %vm149
    %v151 = vsel %vm150, 1, 0
    %v152 = vcvt.s32.f32 %v151
    %v153 = vsel %vm83, %v152, 0.0
    %154 = vadd.xlane.f32.xlu0 %v153
    %v155 = vpop.xlane.xlu0 %154
    %v156 = vrot.slane %v155, 4
    %v157 = vadd.f32 %v155, %v156
    %v158 = vrot.slane %v157, 2
    %v159 = vadd.f32 %v157, %v158
    %v160 = vrot.slane %v159, 1
    %v161 = vadd.f32 %v159, %v160
    %s162 = vtos %v161
    %v163 = vstv %s162
    %v164 = vmul.f32 %v163, 0.00020833334
    %v165 = vmul.u32 %v23, 1024
    %v166 = vadd.s32 %v165, %v21
    %v167 = vsel %vm29, %v166, 4294967295
    %168 = vrot.lane.b32.xlu0 %v167, 1
    %v169 = vpop.permute.xlu0 %168
    %v170 = vsel %vm31, %v169, 4294967295
    %171 = vrot.lane.b32.xlu0 %v170, 1
    %v172 = vpop.permute.xlu0 %171
    %v173 = vsel %vm31, %v172, 4294967295
    %vm174 = vcmp.gt.s32.totalorder %v170, %v173
    %v175 = vsel %vm174, %v170, %v173
    %176 = vrot.lane.b32.xlu0 %v175, 2
    %v177 = vpop.permute.xlu0 %176
    %v178 = vsel %vm40, %v177, 4294967295
    %vm179 = vcmp.gt.s32.totalorder %v175, %v178
    %v180 = vsel %vm179, %v175, %v178
    %181 = vrot.lane.b32.xlu0 %v180, 4
    %v182 = vpop.permute.xlu0 %181
    %v183 = vsel %vm46, %v182, 4294967295
    %vm184 = vcmp.gt.s32.totalorder %v180, %v183
    %v185 = vsel %vm184, %v180, %v183
    %186 = vrot.lane.b32.xlu0 %v185, 8
    %v187 = vpop.permute.xlu0 %186
    %v188 = vsel %vm52, %v187, 4294967295
    %vm189 = vcmp.gt.s32.totalorder %v185, %v188
    %v190 = vsel %vm189, %v185, %v188
    %191 = vrot.lane.b32.xlu0 %v190, 16
    %v192 = vpop.permute.xlu0 %191
    %v193 = vsel %vm58, %v192, 4294967295
    %vm194 = vcmp.gt.s32.totalorder %v190, %v193
    %v195 = vsel %vm194, %v190, %v193
    %196 = vrot.lane.b32.xlu0 %v195, 32
    %v197 = vpop.permute.xlu0 %196
    %v198 = vsel %vm64, %v197, 4294967295
    %vm199 = vcmp.gt.s32.totalorder %v195, %v198
    %v200 = vsel %vm199, %v195, %v198
    %201 = vrot.lane.b32.xlu0 %v200, 64
    %v202 = vpop.permute.xlu0 %201
    %v203 = vsel %vm70, %v202, 4294967295
    %vm204 = vcmp.gt.s32.totalorder %v200, %v203
    %v205 = vsel %vm204, %v200, %v203
    %vm206 = vcmp.ge.s32.totalorder %v205, 0
    %v207 = vand.u32 %v205, 1023
    %v208 = vsub.s32 %v21, %v207
    %vm209 = vmand %vm29, %vm206
    %vm210 = vcmp.gt.s32.totalorder %v208, 12
    %vm211 = vcmp.lt.s32.totalorder %v208, 4294967284
    %vm212 = vmor %vm210, %vm211
    %vm213 = vmand %vm209, %vm212
    %v214 = vsel %vm213, 1, 0
    %v215 = vcvt.s32.f32 %v214
    %v216 = vsel %vm83, %v215, 0.0
    %217 = vadd.xlane.f32.xlu0 %v216
    %v218 = vpop.xlane.xlu0 %217
    %v219 = vrot.slane %v218, 4
    %v220 = vadd.f32 %v218, %v219
    %v221 = vrot.slane %v220, 2
    %v222 = vadd.f32 %v220, %v221
    %v223 = vrot.slane %v222, 1
    %v224 = vadd.f32 %v222, %v223
    %s225 = vtos %v224
    %v226 = vstv %s225
    %v227 = vmul.f32 %v226, 0.25
    %v228 = vadd.f32 %v128, %v164
    %v229 = vmul.f32 %v227, 0.5
    %v230 = vadd.f32 %v228, %v229
    %vm231 = vcmp.eq.s32.totalorder %v23, 0
    %v232 = vsel %vm231, %v128, 0.0
    %vm233 = vcmp.eq.s32.totalorder %v23, 1
    %v234 = vsel %vm233, %v164, 0.0
    %v235 = vadd.f32 %v232, %v234
    %vm236 = vcmp.eq.s32.totalorder %v23, 2
    %v237 = vsel %vm236, %v227, 0.0
    %v238 = vadd.f32 %v235, %v237
    %vm239 = vcmp.eq.s32.totalorder %v23, 3
    %v240 = vsel %vm239, %v230, 0.0
    %v241 = vadd.f32 %v238, %v240
    %242 = vst [vmem:[#allocation5] sm:$0x1] %v241
    // Predicated region
    $region10: #{tpu_custom_call.1} parent=1 // pred_check
      _
    $region11: #{tpu_custom_call.1} parent=1 // pred_check_branch
      %244 = sbr.rel (0) target = $region13
    $region12: #{tpu_custom_call.1} parent=1 // pred_region
      %s246 = ssub.s32 16, 16
      %247 = vsyncadd [#allocation4], %s246
      %s249 = sshll.u32 [#allocation5], 4
      %s250 = int_to_ptr.vmem [resolvable:$true] %s249
      %252 = dma.vmem_to_hbm [thread:$0]  %s250, 16, %s1, [#allocation4]
    $region13: #{tpu_custom_call.1} parent=1 // pred_fallthru
      _
    // Predicated region
    $region14: #{tpu_custom_call.1} parent=1 // pred_check
      _
    $region15: #{tpu_custom_call.1} parent=1 // pred_check_branch
      %254 = sbr.rel (0) target = $region17
    $region16: #{tpu_custom_call.1} parent=1 // pred_region
      %255 = dma.done [#allocation4], 16
    $region17: #{tpu_custom_call.1} parent=1 // pred_fallthru
      _
    %256 = vsyncpa [#allocation3], 1
    %257 = vsyncpa [#allocation4], 1

</llo_original>
